<compile_context>
chip_gen: v6e
topology: v6e:2x2x1
jax: 0.10.0
libtpu: 0.0.40
codegen_flags: <defaults>
</compile_context>

<pallas_src>
import functools

import jax
import jax.numpy as jnp
from jax.experimental import pallas as pl
from jax.experimental.pallas import tpu as pltpu


# ----------------------------------------------------------------------------
# Kernels
# ----------------------------------------------------------------------------
def _pool_kernel(x_ref, sum_ref):
    """Accumulate per-channel spatial sums.

    x_ref:   (1, T, C)  native-dtype tile (C on the lane axis)
    sum_ref: (1, 1, C)  f32 accumulator, resident across the HW-tile grid axis
    """
    t = pl.program_id(1)

    @pl.when(t == 0)
    def _():
        sum_ref[...] = jnp.zeros_like(sum_ref)

    # f32 accumulation; the upcast happens per tile inside vregs -- no
    # full-block f32 copy of x is ever materialized in VMEM.
    sum_ref[...] += jnp.sum(x_ref[...], axis=1, keepdims=True,
                            dtype=jnp.float32)


def _fc_kernel(sum_ref, w1_ref, b1_ref, w2_ref, b2_ref, s_ref, *, inv_hw):
    """Batched SE gate: mean -> fc1 -> relu -> fc2 -> clamp(0, 1).

    All B rows go through the MXU together (M = B), instead of one degenerate
    (1, C) matmul per grid step.
    """
    y = sum_ref[...] * inv_hw                                          # (B, C)
    h = jnp.dot(y, w1_ref[...], preferred_element_type=jnp.float32) + b1_ref[...]
    h = jnp.maximum(h, 0.0)                                            # (B, Cr)
    s = jnp.dot(h, w2_ref[...], preferred_element_type=jnp.float32) + b2_ref[...]
    s_ref[...] = jnp.clip(s, 0.0, 1.0)                                 # (B, C)


def _scale_kernel(x_ref, s_ref, o_ref):
    """out = x * s.  Multiply in x's native dtype; only the gate s is cast."""
    scale = s_ref[...].astype(x_ref.dtype)        # (1, 1, C)
    o_ref[...] = x_ref[...] * scale               # (1, T, C), lane-dense store


# ----------------------------------------------------------------------------
# Wrapper
# ----------------------------------------------------------------------------
def _pick_hw_tile(hw, c, itemsize, target_bytes=2 * 1024 * 1024):
    """Largest multiple-of-8 divisor of hw whose tile is <= ~target_bytes."""
    if hw % 8 != 0:
        return hw  # ragged spatial extent: single full-extent block (legal)
    max_t = max(8, min(hw, target_bytes // max(1, c * itemsize)))
    max_t = max(8, (max_t // 8) * 8)
    t = max_t
    while t >= 8:
        if hw % t == 0:
            return t
        t -= 8
    return hw


def _se_core(x_l, w1, b1, w2, b2):
    """x_l: (B, HW, C) flattened-NHWC activations. Returns the same layout."""
    B, HW, C = x_l.shape
    itemsize = jnp.dtype(x_l.dtype).itemsize

    T = _pick_hw_tile(HW, C, itemsize)
    n_t = HW // T
    blk_bytes = T * C * itemsize
    # double-buffered input + output + headroom; capped under v7x physical VMEM
    vmem_limit = int(min(64 * 1024 * 1024, max(16 * 1024 * 1024, 8 * blk_bytes)))

    # -- Pass 1: per-channel spatial sums (f32), tiled + pipelined over HW ----
    sums = pl.pallas_call(
        _pool_kernel,
        out_shape=jax.ShapeDtypeStruct((B, 1, C), jnp.float32),
        grid_spec=pltpu.PrefetchScalarGridSpec(
            num_scalar_prefetch=0,
            grid=(B, n_t),
            in_specs=[pl.BlockSpec((1, T, C), lambda b, t: (b, t, 0))],
            out_specs=pl.BlockSpec((1, 1, C), lambda b, t: (b, 0, 0)),
        ),
        compiler_params=pltpu.CompilerParams(
            dimension_semantics=("parallel", "arbitrary"),
            vmem_limit_bytes=vmem_limit),
    )(x_l)

    # -- Pass 2: tiny batched FC over the (B, C) means (single Pallas call) ---
    s = pl.pallas_call(
        functools.partial(_fc_kernel, inv_hw=1.0 / HW),
        out_shape=jax.ShapeDtypeStruct((B, C), jnp.float32),
    )(sums.reshape(B, C), w1, b1, w2, b2)

    # -- Pass 3: scale the activations; fully parallel grid, lane-dense stores
    out = pl.pallas_call(
        _scale_kernel,
        out_shape=jax.ShapeDtypeStruct((B, HW, C), x_l.dtype),
        grid_spec=pltpu.PrefetchScalarGridSpec(
            num_scalar_prefetch=0,
            grid=(B, n_t),
            in_specs=[pl.BlockSpec((1, T, C), lambda b, t: (b, t, 0)),
                      pl.BlockSpec((1, 1, C), lambda b, t: (b, 0, 0))],
            out_specs=pl.BlockSpec((1, T, C), lambda b, t: (b, t, 0)),
        ),
        compiler_params=pltpu.CompilerParams(
            dimension_semantics=("parallel", "parallel"),
            vmem_limit_bytes=vmem_limit),
    )(x_l, s.reshape(B, 1, C))

    return out


def se_layer(x_nchw, w1, b1, w2, b2):
    """x_nchw: (B, C, H, W); w1: (C, Cr); b1: (1, Cr); w2: (Cr, C); b2: (1, C).

    Weights are stored (in, out), i.e. the transpose of PyTorch Linear.weight.
    """
    B, C, H, W = x_nchw.shape
    # Layout plumbing only: kernels want channels on the lane axis.
    # TODO(synk): in an NHWC activation pipeline call _se_core directly and
    # drop these transposes (they cost one extra read+write of x in XLA).
    x_l = jnp.transpose(x_nchw.reshape(B, C, H * W), (0, 2, 1))   # (B, HW, C)
    out_l = _se_core(x_l, w1, b1, w2, b2)
    return jnp.transpose(out_l, (0, 2, 1)).reshape(B, C, H, W)


# ----------------------------------------------------------------------------
# Reference + test
# ----------------------------------------------------------------------------
def reference_se(x, w1, b1, w2, b2):
    y = jnp.mean(x, axis=(2, 3))                 # (B, C)
    y = jnp.maximum(y @ w1 + b1, 0.0)            # (B, Cr)
    y = y @ w2 + b2                              # (B, C)
    y = jnp.clip(y, 0.0, 1.0)
    return x * y[:, :, None, None]


if __name__ == "__main__":
    B, C, H, W = 2, 4, 16, 16
    reduction = 4
    Cr = C // reduction

    key = jax.random.PRNGKey(0)
    kx, k1, kb1, k2, kb2 = jax.random.split(key, 5)

    x = jax.random.normal(kx, (B, C, H, W), dtype=jnp.float32)

    # Deterministic synthetic parameters, stored (in, out) for direct dot
    # (equivalent to PyTorch Linear weights of shape (out, in), transposed).
    w1 = jax.random.normal(k1, (C, Cr), dtype=jnp.float32) * 0.5
    b1 = jax.random.normal(kb1, (1, Cr), dtype=jnp.float32) * 0.1
    w2 = jax.random.normal(k2, (Cr, C), dtype=jnp.float32) * 0.5
    b2 = jax.random.normal(kb2, (1, C), dtype=jnp.float32) * 0.1

    out = se_layer(x, w1, b1, w2, b2)
    jax.block_until_ready(out)

    ref = reference_se(x, w1, b1[0], w2, b2[0])
    assert jnp.allclose(out, ref, atol=1e-5, rtol=1e-5), "mismatch vs reference"

    print("KERNEL_OK")
</pallas_src>

<mosaic_0001>
module attributes {stable_mosaic.version = 11 : i64} {
  func.func @_pool_kernel(%arg0: i32, %arg1: i32, %arg2: memref<1x256x4xf32, #tpu.memory_space<vmem>>, %arg3: memref<1x1x4xf32, #tpu.memory_space<vmem>>) attributes {dimension_semantics = [#tpu.dimension_semantics<parallel>, #tpu.dimension_semantics<arbitrary>], iteration_bounds = array<i64: 2, 1>, scalar_prefetch = 0 : i64, scratch_operands = 0 : i64, tpu.core_type = #tpu.core_type<tc>, window_params = [{transform_indices = @transform_0, window_bounds = array<i64: 1, 256, 4>}, {transform_indices = @transform_1, window_bounds = array<i64: 1, 1, 4>}]} {
    %c0_i32 = arith.constant 0 : i32
    %0 = arith.cmpi eq, %arg1, %c0_i32 : i32
    %1 = arith.extui %0 : i1 to i32
    %c0_i32_0 = arith.constant 0 : i32
    %2 = arith.cmpi ne, %1, %c0_i32_0 : i32
    scf.if %2 {
      %cst_9 = arith.constant 0.000000e+00 : f32
      %9 = vector.broadcast %cst_9 : f32 to vector<1x1x4xf32>
      %c0_10 = arith.constant 0 : index
      %c0_11 = arith.constant 0 : index
      %c0_12 = arith.constant 0 : index
      %10 = vector.load %arg3[%c0_10, %c0_11, %c0_12] : memref<1x1x4xf32, #tpu.memory_space<vmem>>, vector<1x1x4xf32>
      tpu.vector_store %arg3[%c0_10, %c0_11, %c0_12], %9 {strides = array<i32>} : memref<1x1x4xf32, #tpu.memory_space<vmem>>, vector<1x1x4xf32>,
    } else {
    }
    %c0 = arith.constant 0 : index
    %c0_1 = arith.constant 0 : index
    %c0_2 = arith.constant 0 : index
    %3 = vector.load %arg3[%c0, %c0_1, %c0_2] : memref<1x1x4xf32, #tpu.memory_space<vmem>>, vector<1x1x4xf32>
    %c0_3 = arith.constant 0 : index
    %c0_4 = arith.constant 0 : index
    %c0_5 = arith.constant 0 : index
    %4 = vector.load %arg2[%c0_3, %c0_4, %c0_5] : memref<1x256x4xf32, #tpu.memory_space<vmem>>, vector<1x256x4xf32>
    %cst = arith.constant dense<0.000000e+00> : vector<1x4xf32>
    %5 = vector.multi_reduction <add>, %4, %cst [1] : vector<1x256x4xf32> to vector<1x4xf32>
    %6 = vector.shape_cast %5 : vector<1x4xf32> to vector<1x1x4xf32>
    %7 = arith.addf %3, %6 : vector<1x1x4xf32>
    %c0_6 = arith.constant 0 : index
    %c0_7 = arith.constant 0 : index
    %c0_8 = arith.constant 0 : index
    %8 = vector.load %arg3[%c0_6, %c0_7, %c0_8] : memref<1x1x4xf32, #tpu.memory_space<vmem>>, vector<1x1x4xf32>
    tpu.vector_store %arg3[%c0_6, %c0_7, %c0_8], %7 {strides = array<i32>} : memref<1x1x4xf32, #tpu.memory_space<vmem>>, vector<1x1x4xf32>,
    return
  }
  func.func @transform_0(%arg0: i32, %arg1: i32) -> (i32, i32, i32) {
    %c0_i32 = arith.constant 0 : i32
    %c0_i32_0 = arith.constant 0 : i32
    return %arg0, %arg1, %c0_i32 : i32, i32, i32
  }
  func.func @transform_1(%arg0: i32, %arg1: i32) -> (i32, i32, i32) {
    %c0_i32 = arith.constant 0 : i32
    %c0_i32_0 = arith.constant 0 : i32
    %c0_i32_1 = arith.constant 0 : i32
    return %arg0, %c0_i32, %c0_i32_0 : i32, i32, i32
  }
}

</mosaic_0001>

<llo_original>
// kernel: tpu_custom_call.1
$region0: #{tpu_custom_call.1}
  #allocation0 [shape = 'u32[]', space=smem, size = 0x4, offset = 0x4, fixed_abs, tag = 'smem constant byte address 0x4 - core index']
  #allocation1 [shape = 'u32[144,128]{1,0:T(1,128)}', space=vmem, size = 0x12000, scoped, tag = 'internal scratch']
  %s0 = inlined_call_operand.vmem [shape: f32[2,256,4], index: 0, kind: input, shape index: {}]
  %s1 = inlined_call_operand.hbm [shape: f32[2,1,4], index: 1, kind: output, shape index: {}]
  %s2 = sld [smem:[#allocation0]]
  $region41: #{tpu_custom_call.1} parent=0
    _
  %s4 = ssub.s32 1, %s2
  %s5 = scalar_select 0, %s4, %s2
  $region1: #{tpu_custom_call.1} parent=0
    #allocation2 [shape = 'u8[1024]{0}', space=vmem, size = 0x400, scoped, tag = 'output window, operand 0']
    #allocation3 [shape = 's32[2]{0}', space=sflag, size = 0x8, scoped, tag = 'scoped memory for tpu_custom_call.1']
    %6 = vsyncpa [#allocation3], 0
    %s7 = scalar_lea.sflag [#allocation3], 1
    %8 = vsyncpa %s7, 0
    loop: start=0, step=1, limit=4
    $region2: #{tpu_custom_call.1} parent=1 // loop_pre_header
      _
    $region3: #{tpu_custom_call.1} parent=1 // loop_header
      %s10 = sphi 0, %s14
      %p11 = scmp.ge.s32.totalorder %s10, 4
      %s17 = sphi 0, %s29
      %s18 = sphi 0, %s25
      %s19 = sphi 0, %s17
      %s20 = sphi 0, %s18
      %s21 = sphi 0, %s19
      %s22 = sphi 0, %s20
      %s34 = sphi 0, %s36
      %s37 = sphi 0, %s34
      %s38 = sphi 0, %s37
      %s54 = sphi 0, %s38
      %s60 = sphi 0, %s62
      %s63 = sphi 0, %s60
      %s64 = sphi 0, %s63
      %s80 = sphi 0, %s64
    $region4: #{tpu_custom_call.1} parent=1 // loop_header_branch
      %13 = sbr.rel (%p11) target = $region8
    $region5: #{tpu_custom_call.1} parent=1 // loop_body
      %s15 = ssub.s32 %s10, 1
      %s16 = ssub.s32 %s10, 2
      %s23 = sadd.s32 1, %s18
      %p24 = scmp.ge.s32.totalorder %s23, 1
      %s25 = scalar_select %p24, 0, %s23
      %s26 = sadd.s32 1, %s17
      %s27 = scalar_select %p24, %s26, %s17
      %p28 = scmp.ge.s32.totalorder %s27, 2
      %s29 = scalar_select %p28, 0, %s27
      %s30 = ssub.s32 %s17, %s29
      %s31 = ssub.s32 %s18, %s25
      %s32 = sor.u32 %s30, %s31
      %p33 = scmp.eq.s32.totalorder %s32, 0
      %s35 = sadd.s32 %s34, 1
      %s36 = scalar_select %p33, %s34, %s35
      %p39 = pneg %p33
      %p40 = scmp.eq.s32.totalorder %s10, 1
      %p41 = por %p39, %p40
      %p42 = scmp.ne.s32.totalorder %s34, %s37
      %p43 = scmp.eq.s32.totalorder %s10, 0
      %p44 = por %p42, %p43
      %p45 = scmp.ne.s32.totalorder %s34, %s37
      %p46 = scmp.eq.s32.totalorder %s15, 1
      %p47 = por %p45, %p46
      %p48 = scmp.ne.s32.totalorder %s37, %s38
      %p49 = scmp.eq.s32.totalorder %s15, 0
      %p50 = por %p48, %p49
      %p51 = scmp.ne.s32.totalorder %s37, %s38
      %p52 = scmp.eq.s32.totalorder %s16, 1
      %p53 = por %p51, %p52
      %p55 = scmp.ne.s32.totalorder %s38, %s54
      %p56 = scmp.eq.s32.totalorder %s16, 0
      %p57 = por %p55, %p56
      %s58 = ssub.s32 %s17, %s29
      %p59 = scmp.eq.s32.totalorder %s58, 0
      %s61 = sadd.s32 %s60, 1
      %s62 = scalar_select %p59, %s60, %s61
      %p65 = pneg %p59
      %p66 = scmp.eq.s32.totalorder %s10, 1
      %p67 = por %p65, %p66
      %p68 = scmp.ne.s32.totalorder %s60, %s63
      %p69 = scmp.eq.s32.totalorder %s10, 0
      %p70 = por %p68, %p69
      %p71 = scmp.ne.s32.totalorder %s60, %s63
      %p72 = scmp.eq.s32.totalorder %s15, 1
      %p73 = por %p71, %p72
      %p74 = scmp.ne.s32.totalorder %s63, %s64
      %p75 = scmp.eq.s32.totalorder %s15, 0
      %p76 = por %p74, %p75
      %p77 = scmp.ne.s32.totalorder %s63, %s64
      %p78 = scmp.eq.s32.totalorder %s16, 1
      %p79 = por %p77, %p78
      %p81 = scmp.ne.s32.totalorder %s64, %s80
      %p82 = scmp.eq.s32.totalorder %s16, 0
      %p83 = por %p81, %p82
      %p84 = scmp.le.s32.totalorder 1, %s10
      %p85 = scmp.lt.s32.totalorder %s10, 3
      %p86 = pnand %p84, %p85
      %p87 = pneg %p86
      // Predicated region
      $region9: #{tpu_custom_call.1} parent=5 // pred_check
        _
      $region10: #{tpu_custom_call.1} parent=5 // pred_check_branch
        %89 = sbr.rel (%p86) target = $region12
      $region11: #{tpu_custom_call.1} parent=5 // pred_region
        %s90 = ssub.s32 %s10, 1
      $region12: #{tpu_custom_call.1} parent=5 // pred_fallthru
        _
      %p91 = scmp.lt.s32.totalorder %s10, 2
      // Predicated region
      $region13: #{tpu_custom_call.1} parent=5 // pred_check
        %p92 = pneg %p91
      $region14: #{tpu_custom_call.1} parent=5 // pred_check_branch
        %94 = sbr.rel (%p92) target = $region16
      $region15: #{tpu_custom_call.1} parent=5 // pred_region
        // Predicated region
        $region17: #{tpu_custom_call.1} parent=15 // pred_check
          %p95 = pneg %p44
        $region18: #{tpu_custom_call.1} parent=15 // pred_check_branch
          %97 = sbr.rel (%p95) target = $region20
        $region19: #{tpu_custom_call.1} parent=15 // pred_region
          %s98 = smul.u32 32, %s18
          %p99 = scmp.lt.s32.totalorder %s17, 1
          %s100 = scalar_select %p99, %s17, 1
          %p101 = scmp.lt.s32.totalorder %s98, 31
          %s102 = scalar_select %p101, %s98, 31
          %s103 = smul.addr %s100, 32
          %s104 = sadd.s32 %s102, %s103
          %s105 = smul.addr %s104, 8
          %s106 = scalar_lea.vmem %s0, %s105
          %s107 = smul.u32 32, %s18
        $region20: #{tpu_custom_call.1} parent=15 // pred_fallthru
          _
      $region16: #{tpu_custom_call.1} parent=5 // pred_fallthru
        _
      %p108 = scmp.le.s32.totalorder 1, %s10
      %p109 = scmp.lt.s32.totalorder %s10, 3
      %p110 = pnand %p108, %p109
      %p111 = pneg %p110
      // Predicated region
      $region21: #{tpu_custom_call.1} parent=5 // pred_check
        _
      $region22: #{tpu_custom_call.1} parent=5 // pred_check_branch
        %113 = sbr.rel (%p110) target = $region24
      $region23: #{tpu_custom_call.1} parent=5 // pred_region
        %s114 = ssub.s32 %s10, 1
        %s115 = smul.u32 32, %s20
        %p116 = scmp.lt.s32.totalorder %s19, 1
        %s117 = scalar_select %p116, %s19, 1
        %p118 = scmp.lt.s32.totalorder %s115, 31
        %s119 = scalar_select %p118, %s115, 31
        %s120 = smul.addr %s117, 32
        %s121 = sadd.s32 %s119, %s120
        %s122 = smul.addr %s121, 8
        %s123 = scalar_lea.vmem %s0, %s122
        %p124 = pneg %p50
        %p125 = pneg %p47
        %p126 = pneg %p76
        %p127 = pneg %p73
        %s128 = sand.u32 %s63, 1
        %s129 = scalar_lea.sflag [#allocation3], %s128
        %s130 = sand.u32 %s63, 1
        %s131 = scalar_lea.vmem [#allocation2], %s130
        %s132 = smul.u32 32, %s20
        %p133 = scmp.lt.s32.totalorder %s19, 1
        %s134 = scalar_select %p133, %s19, 1
        %p135 = scmp.lt.s32.totalorder %s132, 31
        %s136 = scalar_select %p135, %s132, 31
        %s137 = smul.addr %s134, 32
        %s138 = sadd.s32 %s136, %s137
        %s139 = smul.addr %s138, 8
        %s140 = scalar_lea.vmem %s0, %s139
        %s141 = smul.u32 32, %s20
        %p142 = scmp.eq.s32.totalorder %s20, 0
        // Predicated region
        $region25: #{tpu_custom_call.1} parent=23 // pred_check
          %p143 = pneg %p142
        $region26: #{tpu_custom_call.1} parent=23 // pred_check_branch
          %145 = sbr.rel (%p143) target = $region28
        $region27: #{tpu_custom_call.1} parent=23 // pred_region
          %vm146 = vcmask 24576
          %147 = vst.msk [vmem:[%s131] sm:$0x1] %vm146, 0.0
        $region28: #{tpu_custom_call.1} parent=23 // pred_fallthru
          _
        %v148 = vld [vmem:[%s131] sm:$0x1]
        %v149 = vld [vmem:[%s140] sm:$0xff]
        %v150 = vld [vmem:[%s140 + $0x8] sm:$0xff]
        %v151 = vld [vmem:[%s140 + $0x10] sm:$0xff]
        %v152 = vld [vmem:[%s140 + $0x18] sm:$0xff]
        %v153 = vld [vmem:[%s140 + $0x20] sm:$0xff]
        %v154 = vld [vmem:[%s140 + $0x28] sm:$0xff]
        %v155 = vld [vmem:[%s140 + $0x30] sm:$0xff]
        %v156 = vld [vmem:[%s140 + $0x38] sm:$0xff]
        %v157 = vld [vmem:[%s140 + $0x40] sm:$0xff]
        %v158 = vld [vmem:[%s140 + $0x48] sm:$0xff]
        %v159 = vld [vmem:[%s140 + $0x50] sm:$0xff]
        %v160 = vld [vmem:[%s140 + $0x58] sm:$0xff]
        %v161 = vld [vmem:[%s140 + $0x60] sm:$0xff]
        %v162 = vld [vmem:[%s140 + $0x68] sm:$0xff]
        %v163 = vld [vmem:[%s140 + $0x70] sm:$0xff]
        %v164 = vld [vmem:[%s140 + $0x78] sm:$0xff]
        %v165 = vld [vmem:[%s140 + $0x80] sm:$0xff]
        %v166 = vld [vmem:[%s140 + $0x88] sm:$0xff]
        %v167 = vld [vmem:[%s140 + $0x90] sm:$0xff]
        %v168 = vld [vmem:[%s140 + $0x98] sm:$0xff]
        %v169 = vld [vmem:[%s140 + $0xa0] sm:$0xff]
        %v170 = vld [vmem:[%s140 + $0xa8] sm:$0xff]
        %v171 = vld [vmem:[%s140 + $0xb0] sm:$0xff]
        %v172 = vld [vmem:[%s140 + $0xb8] sm:$0xff]
        %v173 = vld [vmem:[%s140 + $0xc0] sm:$0xff]
        %v174 = vld [vmem:[%s140 + $0xc8] sm:$0xff]
        %v175 = vld [vmem:[%s140 + $0xd0] sm:$0xff]
        %v176 = vld [vmem:[%s140 + $0xd8] sm:$0xff]
        %v177 = vld [vmem:[%s140 + $0xe0] sm:$0xff]
        %v178 = vld [vmem:[%s140 + $0xe8] sm:$0xff]
        %v179 = vld [vmem:[%s140 + $0xf0] sm:$0xff]
        %v180 = vld [vmem:[%s140 + $0xf8] sm:$0xff]
        %vm181 = vcmask 31744
        %v182 = vsel %vm181, %v149, 0.0
        %v183 = vsel %vm181, %v150, 0.0
        %v184 = vadd.f32 %v182, %v183
        %v185 = vsel %vm181, %v151, 0.0
        %v186 = vadd.f32 %v184, %v185
        %v187 = vsel %vm181, %v152, 0.0
        %v188 = vadd.f32 %v186, %v187
        %v189 = vsel %vm181, %v153, 0.0
        %v190 = vadd.f32 %v188, %v189
        %v191 = vsel %vm181, %v154, 0.0
        %v192 = vadd.f32 %v190, %v191
        %v193 = vsel %vm181, %v155, 0.0
        %v194 = vadd.f32 %v192, %v193
        %v195 = vsel %vm181, %v156, 0.0
        %v196 = vadd.f32 %v194, %v195
        %v197 = vsel %vm181, %v157, 0.0
        %v198 = vadd.f32 %v196, %v197
        %v199 = vsel %vm181, %v158, 0.0
        %v200 = vadd.f32 %v198, %v199
        %v201 = vsel %vm181, %v159, 0.0
        %v202 = vadd.f32 %v200, %v201
        %v203 = vsel %vm181, %v160, 0.0
        %v204 = vadd.f32 %v202, %v203
        %v205 = vsel %vm181, %v161, 0.0
        %v206 = vadd.f32 %v204, %v205
        %v207 = vsel %vm181, %v162, 0.0
        %v208 = vadd.f32 %v206, %v207
        %v209 = vsel %vm181, %v163, 0.0
        %v210 = vadd.f32 %v208, %v209
        %v211 = vsel %vm181, %v164, 0.0
        %v212 = vadd.f32 %v210, %v211
        %v213 = vsel %vm181, %v165, 0.0
        %v214 = vadd.f32 %v212, %v213
        %v215 = vsel %vm181, %v166, 0.0
        %v216 = vadd.f32 %v214, %v215
        %v217 = vsel %vm181, %v167, 0.0
        %v218 = vadd.f32 %v216, %v217
        %v219 = vsel %vm181, %v168, 0.0
        %v220 = vadd.f32 %v218, %v219
        %v221 = vsel %vm181, %v169, 0.0
        %v222 = vadd.f32 %v220, %v221
        %v223 = vsel %vm181, %v170, 0.0
        %v224 = vadd.f32 %v222, %v223
        %v225 = vsel %vm181, %v171, 0.0
        %v226 = vadd.f32 %v224, %v225
        %v227 = vsel %vm181, %v172, 0.0
        %v228 = vadd.f32 %v226, %v227
        %v229 = vsel %vm181, %v173, 0.0
        %v230 = vadd.f32 %v228, %v229
        %v231 = vsel %vm181, %v174, 0.0
        %v232 = vadd.f32 %v230, %v231
        %v233 = vsel %vm181, %v175, 0.0
        %v234 = vadd.f32 %v232, %v233
        %v235 = vsel %vm181, %v176, 0.0
        %v236 = vadd.f32 %v234, %v235
        %v237 = vsel %vm181, %v177, 0.0
        %v238 = vadd.f32 %v236, %v237
        %v239 = vsel %vm181, %v178, 0.0
        %v240 = vadd.f32 %v238, %v239
        %v241 = vsel %vm181, %v179, 0.0
        %v242 = vadd.f32 %v240, %v241
        %v243 = vsel %vm181, %v180, 0.0
        %v244 = vadd.f32 %v242, %v243
        %v245 = vrot.slane %v244, 4
        %v246 = vadd.f32 %v244, %v245
        %v247 = vrot.slane %v246, 2
        %v248 = vadd.f32 %v246, %v247
        %v249 = vrot.slane %v248, 1
        %v250 = vadd.f32 %v248, %v249
        %v251 = vadd.f32 %v148, %v250
        %vm252 = vcmask 24576
        %253 = vst.msk [vmem:[%s131] sm:$0x1] %vm252, %v251
        %s254 = sand.u32 %s63, 1
        %s255 = scalar_lea.sflag [#allocation3], %s254
        %s256 = sand.u32 %s63, 1
        %s257 = scalar_lea.vmem [#allocation2], %s256
        // Predicated region
        $region29: #{tpu_custom_call.1} parent=23 // pred_check
          %p258 = pneg %p73
        $region30: #{tpu_custom_call.1} parent=23 // pred_check_branch
          %260 = sbr.rel (%p258) target = $region32
        $region31: #{tpu_custom_call.1} parent=23 // pred_region
          %s262 = ssub.s32 16, 16
          %263 = vsyncadd %s255, %s262
          %s264 = smul.addr %s19, 16
          %s265 = scalar_lea.hbm %s1, %s264
          %s267 = sshll.u32 %s257, 4
          %s268 = int_to_ptr.vmem [resolvable:$true] %s267
          %270 = dma.vmem_to_hbm [thread:$0]  %s268, 16, %s265, %s255
        $region32: #{tpu_custom_call.1} parent=23 // pred_fallthru
          _
      $region24: #{tpu_custom_call.1} parent=5 // pred_fallthru
        _
      %p271 = scmp.le.s32.totalorder 2, %s10
      // Predicated region
      $region33: #{tpu_custom_call.1} parent=5 // pred_check
        %p272 = pneg %p271
      $region34: #{tpu_custom_call.1} parent=5 // pred_check_branch
        %274 = sbr.rel (%p272) target = $region36
      $region35: #{tpu_custom_call.1} parent=5 // pred_region
        %s275 = ssub.s32 %s10, 2
        // Predicated region
        $region37: #{tpu_custom_call.1} parent=35 // pred_check
          %p276 = pneg %p79
        $region38: #{tpu_custom_call.1} parent=35 // pred_check_branch
          %278 = sbr.rel (%p276) target = $region40
        $region39: #{tpu_custom_call.1} parent=35 // pred_region
          %s279 = sand.u32 %s64, 1
          %s280 = scalar_lea.sflag [#allocation3], %s279
          %s281 = sand.u32 %s64, 1
          %s282 = scalar_lea.vmem [#allocation2], %s281
          %283 = dma.done %s280, 16
        $region40: #{tpu_custom_call.1} parent=35 // pred_fallthru
          _
      $region36: #{tpu_custom_call.1} parent=5 // pred_fallthru
        _
    $region6: #{tpu_custom_call.1} parent=1 // loop_footer
      %s14 = sadd.s32 1, %s10
    $region7: #{tpu_custom_call.1} parent=1 // loop_footer_branch
      %9 = sbr.rel target = $region3
    $region8: #{tpu_custom_call.1} parent=1 // loop_exit
      _
    %284 = vsyncpa [#allocation3], 1
    %s285 = scalar_lea.sflag [#allocation3], 1
    %286 = vsyncpa %s285, 1

</llo_original>
